<compile_context>
chip_gen: v7x
topology: tpu7x:2x2x1
jax: 0.10.0
libtpu: 0.0.40
codegen_flags: <defaults>
</compile_context>

<pallas_src>
import functools

import jax
import jax.numpy as jnp
from jax.experimental import pallas as pl
from jax.experimental.pallas import tpu as pltpu


def _to_tuple(x):
    if isinstance(x, int):
        return (x, x)
    return tuple(x)


def _ds(start, size, stride=1):
    """Static dynamic-slice helper; omit stride when it is 1."""
    if stride == 1:
        return pl.ds(start, size)
    return pl.ds(start, size, stride)


def _out_size(in_sz, pad, dil, k, s, ceil_mode):
    """PyTorch max_pool2d output-size rule (incl. ceil-mode correction)."""
    eff_k = dil * (k - 1) + 1
    num = in_sz + 2 * pad - eff_k
    if ceil_mode:
        out = -(-num // s) + 1
        # Last window must start inside the input or the left padding.
        if (out - 1) * s >= in_sz + pad:
            out -= 1
    else:
        out = num // s + 1
    return out


def _axis_taps(in_sz, out_sz, pad, dil, k, s):
    """Per kernel tap along one axis: (in_start, n_valid, out_start, full)."""
    taps = []
    for t in range(k):
        base = t * dil - pad                    # input coord for output idx 0
        lo = 0 if base >= 0 else ((-base) + s - 1) // s
        hi = min(out_sz - 1, (in_sz - 1 - base) // s)
        if hi < lo:                             # tap never hits valid input
            taps.append(None)
            continue
        n = hi - lo + 1
        taps.append((base + lo * s, n, lo, n == out_sz))
    return taps


def _maxpool_kernel(x_ref, o_ref, *, offsets, sh, sw, init_out):
    """Max-pool one (H, W, TP) lane chunk into (Ho, Wo, TP).

    H is the leading axis, W sits on sublanes, the flattened channel axis P on
    lanes, so every load/store is lane-dense.  Each static tap is a strided
    ref load of only (n_h, n_w, TP) elements; borders from padding/ceil-mode
    are handled by initializing the output block to -inf and letting each tap
    update only the output sub-rectangle it is valid for.
    """
    if init_out:
        if jnp.issubdtype(o_ref.dtype, jnp.floating):
            fill = -jnp.inf
        else:
            fill = jnp.iinfo(o_ref.dtype).min
        o_ref[...] = jnp.full(o_ref.shape, fill, dtype=o_ref.dtype)
        for (ih0, nh, oh0, iw0, nw, ow0) in offsets:
            win = x_ref[_ds(ih0, nh, sh), _ds(iw0, nw, sw), :]
            osl = (_ds(oh0, nh), _ds(ow0, nw), slice(None))
            o_ref[osl] = jnp.maximum(o_ref[osl], win)
    else:
        # Fast path: every tap covers the full output -> pure value max-chain.
        acc = None
        for (ih0, nh, oh0, iw0, nw, ow0) in offsets:
            win = x_ref[_ds(ih0, nh, sh), _ds(iw0, nw, sw), :]
            acc = win if acc is None else jnp.maximum(acc, win)
        o_ref[...] = acc


def _max_pool2d_lane_dense(xt, kh, kw, sh, sw, ph, pw, dh, dw, ceil_mode):
    """Max-pool a lane-dense (H, W, P) array -> (Ho, Wo, P)."""
    h, w, p = xt.shape
    ho = _out_size(h, ph, dh, kh, sh, ceil_mode)
    wo = _out_size(w, pw, dw, kw, sw, ceil_mode)

    h_taps = _axis_taps(h, ho, ph, dh, kh, sh)
    w_taps = _axis_taps(w, wo, pw, dw, kw, sw)
    offsets = []
    all_full = True
    for ht in h_taps:
        if ht is None:
            all_full = False
            continue
        ih0, nh, oh0, fh = ht
        for wt in w_taps:
            if wt is None:
                all_full = False
                continue
            iw0, nw, ow0, fw = wt
            offsets.append((ih0, nh, oh0, iw0, nw, ow0))
            all_full = all_full and fh and fw
    init_out = (not all_full) or (not offsets)

    # Per-chip block budget (v5e/v6e: 128 MiB VMEM; v7x: 64 MiB).
    try:
        vmem_cap = pltpu.get_tpu_info().vmem_capacity_bytes
    except Exception:  # pragma: no cover - conservative fallback
        vmem_cap = 64 * 1024 * 1024
    if vmem_cap >= 96 * 1024 * 1024:
        budget, vmem_limit = 56 * 1024 * 1024, 100 * 1024 * 1024
    else:
        budget, vmem_limit = 22 * 1024 * 1024, 48 * 1024 * 1024

    itemsize = jnp.dtype(xt.dtype).itemsize
    per_lane = itemsize * 2 * (h * w + ho * wo)   # double-buffered in + out
    if per_lane * min(p, 128) > budget:
        # TODO(synk): tile output spatial dims with halo'd input blocks for
        # very large H*W instead of failing here.
        raise NotImplementedError(
            "ZonoMaxPool2dPallas: spatial extent too large for one VMEM block")

    block_p = max(128, (budget // per_lane) // 128 * 128)
    # Target >= ~4 lane chunks when P allows: feeds both v7x TensorCores and
    # gives the BlockSpec pipeline DMA/compute overlap.
    chunk_target = pl.cdiv(pl.cdiv(p, 4), 128) * 128
    block_p = min(block_p, max(128, chunk_target))
    if p <= block_p:
        block_p = p                 # full-dim block (no lane padding needed)
    grid = (pl.cdiv(p, block_p),)   # trailing block may be ragged — fine

    kernel = functools.partial(_maxpool_kernel, offsets=tuple(offsets),
                               sh=sh, sw=sw, init_out=init_out)

    return pl.pallas_call(
        kernel,
        out_shape=jax.ShapeDtypeStruct((ho, wo, p), xt.dtype),
        grid=grid,
        in_specs=[pl.BlockSpec((h, w, block_p), lambda i: (0, 0, i))],
        out_specs=pl.BlockSpec((ho, wo, block_p), lambda i: (0, 0, i)),
        compiler_params=pltpu.CompilerParams(
            dimension_semantics=("parallel",),
            vmem_limit_bytes=vmem_limit),
        cost_estimate=pl.CostEstimate(
            flops=p * ho * wo * max(len(offsets), 1),
            transcendentals=0,
            bytes_accessed=itemsize * p * (h * w + ho * wo)),
    )(xt)


@functools.partial(jax.jit, static_argnums=(2, 3, 4, 5, 6))
def _zono_max_pool2d(center, generators, kernel_size, stride, padding,
                     dilation, ceil_mode):
    """Pool center (N,C,H,W) and generators (G,N,C,H,W) identically."""
    kh, kw = kernel_size
    sh, sw = (kh, kw) if stride is None else stride
    ph, pw = padding
    dh, dw = dilation

    n, c, h, w = center.shape
    g = generators.shape[0]

    # Lane-dense relayout (H, W, P): one transpose pass per tensor; no concat
    # and no lane padding (those extra HBM passes are gone).
    ct = jnp.transpose(center, (2, 3, 0, 1)).reshape(h, w, n * c)
    gt = jnp.transpose(generators, (3, 4, 0, 1, 2)).reshape(h, w, g * n * c)

    oc = _max_pool2d_lane_dense(ct, kh, kw, sh, sw, ph, pw, dh, dw, ceil_mode)
    og = _max_pool2d_lane_dense(gt, kh, kw, sh, sw, ph, pw, dh, dw, ceil_mode)
    ho, wo = oc.shape[0], oc.shape[1]

    pooled_c = jnp.transpose(oc.reshape(ho, wo, n, c), (2, 3, 0, 1))
    pooled_g = jnp.transpose(og.reshape(ho, wo, g, n, c), (2, 3, 4, 0, 1))
    return pooled_c, pooled_g


class ZonoMaxPool2dPallas:
    """JAX/Pallas port of ZonoMaxPool2d (no learnable parameters)."""

    def __init__(self, kernel_size, stride=None, padding=0, dilation=1,
                 ceil_mode=False):
        self.kernel_size = _to_tuple(kernel_size)
        self.stride = _to_tuple(stride) if stride is not None else None
        self.padding = _to_tuple(padding)
        self.dilation = _to_tuple(dilation)
        self.ceil_mode = bool(ceil_mode)
        self.__name__ = 'ZonoMaxPool2d'

    def __call__(self, center, generators):
        """center: (N, C, H, W); generators: (G, N, C, H, W)."""
        return _zono_max_pool2d(center, generators, self.kernel_size,
                                self.stride, self.padding, self.dilation,
                                self.ceil_mode)


def _ref_max_pool2d(x, kernel_size, stride, padding):
    """Pure-JAX reference (dilation=1, floor mode) via reduce_window."""
    kh, kw = _to_tuple(kernel_size)
    sh, sw = _to_tuple(stride if stride is not None else kernel_size)
    ph, pw = _to_tuple(padding)
    return jax.lax.reduce_window(
        x, -jnp.inf, jax.lax.max,
        window_dimensions=(1, 1, kh, kw),
        window_strides=(1, 1, sh, sw),
        padding=((0, 0), (0, 0), (ph, ph), (pw, pw)),
    )


if __name__ == "__main__":
    key = jax.random.PRNGKey(0)
    k_c, k_g = jax.random.split(key)

    N, C, H, W = 2, 4, 16, 16
    G = 3  # number of zonotope generators

    center = jax.random.normal(k_c, (N, C, H, W), dtype=jnp.float32)
    generators = jax.random.normal(k_g, (G, N, C, H, W), dtype=jnp.float32)

    # Case 1: MaxPool2d(kernel_size=2, stride=2) — full-cover fast path.
    layer = ZonoMaxPool2dPallas(kernel_size=2, stride=2)
    pc, pg = layer(center, generators)
    jax.block_until_ready(pc)
    jax.block_until_ready(pg)

    ref_c = _ref_max_pool2d(center, 2, 2, 0)
    ref_g = jax.vmap(lambda z: _ref_max_pool2d(z, 2, 2, 0))(generators)
    assert pc.shape == (N, C, H // 2, W // 2)
    assert pg.shape == (G, N, C, H // 2, W // 2)
    assert jnp.allclose(pc, ref_c)
    assert jnp.allclose(pg, ref_g)

    # Case 2: MaxPool2d(kernel_size=3, stride=2, padding=1) — border path
    # (per-tap coverage + in-kernel -inf init, no pad scratch).
    layer2 = ZonoMaxPool2dPallas(kernel_size=3, stride=2, padding=1)
    pc2, pg2 = layer2(center, generators)
    jax.block_until_ready(pc2)
    jax.block_until_ready(pg2)

    ref_c2 = _ref_max_pool2d(center, 3, 2, 1)
    ref_g2 = jax.vmap(lambda z: _ref_max_pool2d(z, 3, 2, 1))(generators)
    assert pc2.shape == ref_c2.shape
    assert pg2.shape == (G,) + ref_c2.shape
    assert jnp.allclose(pc2, ref_c2)
    assert jnp.allclose(pg2, ref_g2)

    print("KERNEL_OK")
</pallas_src>

<mosaic_0001>
module attributes {stable_mosaic.version = 11 : i64} {
  func.func @_maxpool_kernel(%arg0: i32, %arg1: memref<16x16x8xf32, #tpu.memory_space<vmem>>, %arg2: memref<8x8x8xf32, #tpu.memory_space<vmem>>) attributes {dimension_semantics = [#tpu.dimension_semantics<parallel>], iteration_bounds = array<i64: 1>, scalar_prefetch = 0 : i64, scratch_operands = 0 : i64, tpu.core_type = #tpu.core_type<tc>, window_params = [{transform_indices = @transform_0, window_bounds = array<i64: 16, 16, 8>}, {transform_indices = @transform_1, window_bounds = array<i64: 8, 8, 8>}]} {
    %c0 = arith.constant 0 : index
    %c0_0 = arith.constant 0 : index
    %c0_1 = arith.constant 0 : index
    %0 = tpu.strided_load %arg1[%c0, %c0_0, %c0_1] {strides = array<i32: 2, 2, 1>} : memref<16x16x8xf32, #tpu.memory_space<vmem>>, vector<8x8x8xf32>
    %c0_2 = arith.constant 0 : index
    %c1 = arith.constant 1 : index
    %c0_3 = arith.constant 0 : index
    %1 = tpu.strided_load %arg1[%c0_2, %c1, %c0_3] {strides = array<i32: 2, 2, 1>} : memref<16x16x8xf32, #tpu.memory_space<vmem>>, vector<8x8x8xf32>
    %2 = arith.maximumf %0, %1 : vector<8x8x8xf32>
    %c1_4 = arith.constant 1 : index
    %c0_5 = arith.constant 0 : index
    %c0_6 = arith.constant 0 : index
    %3 = tpu.strided_load %arg1[%c1_4, %c0_5, %c0_6] {strides = array<i32: 2, 2, 1>} : memref<16x16x8xf32, #tpu.memory_space<vmem>>, vector<8x8x8xf32>
    %4 = arith.maximumf %2, %3 : vector<8x8x8xf32>
    %c1_7 = arith.constant 1 : index
    %c1_8 = arith.constant 1 : index
    %c0_9 = arith.constant 0 : index
    %5 = tpu.strided_load %arg1[%c1_7, %c1_8, %c0_9] {strides = array<i32: 2, 2, 1>} : memref<16x16x8xf32, #tpu.memory_space<vmem>>, vector<8x8x8xf32>
    %6 = arith.maximumf %4, %5 : vector<8x8x8xf32>
    %c0_10 = arith.constant 0 : index
    %c0_11 = arith.constant 0 : index
    %c0_12 = arith.constant 0 : index
    %7 = vector.load %arg2[%c0_10, %c0_11, %c0_12] : memref<8x8x8xf32, #tpu.memory_space<vmem>>, vector<8x8x8xf32>
    tpu.vector_store %arg2[%c0_10, %c0_11, %c0_12], %6 {strides = array<i32>} : memref<8x8x8xf32, #tpu.memory_space<vmem>>, vector<8x8x8xf32>,
    return
  }
  func.func @transform_0(%arg0: i32) -> (i32, i32, i32) {
    %c0_i32 = arith.constant 0 : i32
    %c0_i32_0 = arith.constant 0 : i32
    %c0_i32_1 = arith.constant 0 : i32
    return %c0_i32, %c0_i32_0, %arg0 : i32, i32, i32
  }
  func.func @transform_1(%arg0: i32) -> (i32, i32, i32) {
    %c0_i32 = arith.constant 0 : i32
    %c0_i32_0 = arith.constant 0 : i32
    %c0_i32_1 = arith.constant 0 : i32
    return %c0_i32, %c0_i32_0, %arg0 : i32, i32, i32
  }
}

module attributes {stable_mosaic.version = 11 : i64} {
  func.func @_maxpool_kernel(%arg0: i32, %arg1: memref<16x16x24xf32, #tpu.memory_space<vmem>>, %arg2: memref<8x8x24xf32, #tpu.memory_space<vmem>>) attributes {dimension_semantics = [#tpu.dimension_semantics<parallel>], iteration_bounds = array<i64: 1>, scalar_prefetch = 0 : i64, scratch_operands = 0 : i64, tpu.core_type = #tpu.core_type<tc>, window_params = [{transform_indices = @transform_0, window_bounds = array<i64: 16, 16, 24>}, {transform_indices = @transform_1, window_bounds = array<i64: 8, 8, 24>}]} {
    %c0 = arith.constant 0 : index
    %c0_0 = arith.constant 0 : index
    %c0_1 = arith.constant 0 : index
    %0 = tpu.strided_load %arg1[%c0, %c0_0, %c0_1] {strides = array<i32: 2, 2, 1>} : memref<16x16x24xf32, #tpu.memory_space<vmem>>, vector<8x8x24xf32>
    %c0_2 = arith.constant 0 : index
    %c1 = arith.constant 1 : index
    %c0_3 = arith.constant 0 : index
    %1 = tpu.strided_load %arg1[%c0_2, %c1, %c0_3] {strides = array<i32: 2, 2, 1>} : memref<16x16x24xf32, #tpu.memory_space<vmem>>, vector<8x8x24xf32>
    %2 = arith.maximumf %0, %1 : vector<8x8x24xf32>
    %c1_4 = arith.constant 1 : index
    %c0_5 = arith.constant 0 : index
    %c0_6 = arith.constant 0 : index
    %3 = tpu.strided_load %arg1[%c1_4, %c0_5, %c0_6] {strides = array<i32: 2, 2, 1>} : memref<16x16x24xf32, #tpu.memory_space<vmem>>, vector<8x8x24xf32>
    %4 = arith.maximumf %2, %3 : vector<8x8x24xf32>
    %c1_7 = arith.constant 1 : index
    %c1_8 = arith.constant 1 : index
    %c0_9 = arith.constant 0 : index
    %5 = tpu.strided_load %arg1[%c1_7, %c1_8, %c0_9] {strides = array<i32: 2, 2, 1>} : memref<16x16x24xf32, #tpu.memory_space<vmem>>, vector<8x8x24xf32>
    %6 = arith.maximumf %4, %5 : vector<8x8x24xf32>
    %c0_10 = arith.constant 0 : index
    %c0_11 = arith.constant 0 : index
    %c0_12 = arith.constant 0 : index
    %7 = vector.load %arg2[%c0_10, %c0_11, %c0_12] : memref<8x8x24xf32, #tpu.memory_space<vmem>>, vector<8x8x24xf32>
    tpu.vector_store %arg2[%c0_10, %c0_11, %c0_12], %6 {strides = array<i32>} : memref<8x8x24xf32, #tpu.memory_space<vmem>>, vector<8x8x24xf32>,
    return
  }
  func.func @transform_0(%arg0: i32) -> (i32, i32, i32) {
    %c0_i32 = arith.constant 0 : i32
    %c0_i32_0 = arith.constant 0 : i32
    %c0_i32_1 = arith.constant 0 : i32
    return %c0_i32, %c0_i32_0, %arg0 : i32, i32, i32
  }
  func.func @transform_1(%arg0: i32) -> (i32, i32, i32) {
    %c0_i32 = arith.constant 0 : i32
    %c0_i32_0 = arith.constant 0 : i32
    %c0_i32_1 = arith.constant 0 : i32
    return %c0_i32, %c0_i32_0, %arg0 : i32, i32, i32
  }
}

</mosaic_0001>

<llo_original>
// kernel: _zono_max_pool2d.2
$region0: #{_zono_max_pool2d.2}
  #allocation0 [shape = 'u32[]', space=smem, size = 0x4, offset = 0x4, fixed_abs, tag = 'smem constant byte address 0x4 - core index']
  #allocation1 [shape = 'u32[144,128]{1,0:T(1,128)}', space=vmem, size = 0x12000, scoped, tag = 'internal scratch']
  %s0 = inlined_call_operand.vmem [shape: f32[16,16,8], index: 0, kind: input, shape index: {}]
  %s1 = inlined_call_operand.vmem [shape: f32[8,8,8], index: 1, kind: output, shape index: {}]
  %s2 = sld [smem:[#allocation0]]
  $region14: #{_zono_max_pool2d.2} parent=0
    _
  %s4 = ssub.s32 1, %s2
  %s5 = scalar_select 0, %s4, %s2
  // Predicated region
  $region2: #{_zono_max_pool2d.2} parent=0 // pred_check
    _
  $region3: #{_zono_max_pool2d.2} parent=0 // pred_check_branch
    %7 = sbr.rel (0) target = $region5
  $region4: #{_zono_max_pool2d.2} parent=0 // pred_region
    _
  $region5: #{_zono_max_pool2d.2} parent=0 // pred_fallthru
    _
  %v8 = vld [vmem:[%s0] ss:$2 sm:$0xff]
  %s9 = scalar_lea.vmem %s0, 32
  %v10 = vld [vmem:[%s9] ss:$2 sm:$0xff]
  %s11 = scalar_lea.vmem %s0, 64
  %v12 = vld [vmem:[%s11] ss:$2 sm:$0xff]
  %s13 = scalar_lea.vmem %s0, 96
  %v14 = vld [vmem:[%s13] ss:$2 sm:$0xff]
  %s15 = scalar_lea.vmem %s0, 128
  %v16 = vld [vmem:[%s15] ss:$2 sm:$0xff]
  %s17 = scalar_lea.vmem %s0, 160
  %v18 = vld [vmem:[%s17] ss:$2 sm:$0xff]
  %s19 = scalar_lea.vmem %s0, 192
  %v20 = vld [vmem:[%s19] ss:$2 sm:$0xff]
  %s21 = scalar_lea.vmem %s0, 224
  %v22 = vld [vmem:[%s21] ss:$2 sm:$0xff]
  %s23 = scalar_lea.vmem %s0, 1
  %v24 = vld [vmem:[%s23] ss:$2 sm:$0xff]
  %s25 = scalar_lea.vmem %s0, 33
  %v26 = vld [vmem:[%s25] ss:$2 sm:$0xff]
  %s27 = scalar_lea.vmem %s0, 65
  %v28 = vld [vmem:[%s27] ss:$2 sm:$0xff]
  %s29 = scalar_lea.vmem %s0, 97
  %v30 = vld [vmem:[%s29] ss:$2 sm:$0xff]
  %s31 = scalar_lea.vmem %s0, 129
  %v32 = vld [vmem:[%s31] ss:$2 sm:$0xff]
  %s33 = scalar_lea.vmem %s0, 161
  %v34 = vld [vmem:[%s33] ss:$2 sm:$0xff]
  %s35 = scalar_lea.vmem %s0, 193
  %v36 = vld [vmem:[%s35] ss:$2 sm:$0xff]
  %s37 = scalar_lea.vmem %s0, 225
  %v38 = vld [vmem:[%s37] ss:$2 sm:$0xff]
  %v39 = vmax.f32 %v8, %v24
  %v40 = vmax.f32 %v10, %v26
  %v41 = vmax.f32 %v12, %v28
  %v42 = vmax.f32 %v14, %v30
  %v43 = vmax.f32 %v16, %v32
  %v44 = vmax.f32 %v18, %v34
  %v45 = vmax.f32 %v20, %v36
  %v46 = vmax.f32 %v22, %v38
  %s47 = scalar_lea.vmem %s0, 16
  %v48 = vld [vmem:[%s47] ss:$2 sm:$0xff]
  %s49 = scalar_lea.vmem %s47, 32
  %v50 = vld [vmem:[%s49] ss:$2 sm:$0xff]
  %s51 = scalar_lea.vmem %s47, 64
  %v52 = vld [vmem:[%s51] ss:$2 sm:$0xff]
  %s53 = scalar_lea.vmem %s47, 96
  %v54 = vld [vmem:[%s53] ss:$2 sm:$0xff]
  %s55 = scalar_lea.vmem %s47, 128
  %v56 = vld [vmem:[%s55] ss:$2 sm:$0xff]
  %s57 = scalar_lea.vmem %s47, 160
  %v58 = vld [vmem:[%s57] ss:$2 sm:$0xff]
  %s59 = scalar_lea.vmem %s47, 192
  %v60 = vld [vmem:[%s59] ss:$2 sm:$0xff]
  %s61 = scalar_lea.vmem %s47, 224
  %v62 = vld [vmem:[%s61] ss:$2 sm:$0xff]
  %v63 = vmax.f32 %v39, %v48
  %v64 = vmax.f32 %v40, %v50
  %v65 = vmax.f32 %v41, %v52
  %v66 = vmax.f32 %v42, %v54
  %v67 = vmax.f32 %v43, %v56
  %v68 = vmax.f32 %v44, %v58
  %v69 = vmax.f32 %v45, %v60
  %v70 = vmax.f32 %v46, %v62
  %s71 = scalar_lea.vmem %s47, 1
  %v72 = vld [vmem:[%s71] ss:$2 sm:$0xff]
  %s73 = scalar_lea.vmem %s47, 33
  %v74 = vld [vmem:[%s73] ss:$2 sm:$0xff]
  %s75 = scalar_lea.vmem %s47, 65
  %v76 = vld [vmem:[%s75] ss:$2 sm:$0xff]
  %s77 = scalar_lea.vmem %s47, 97
  %v78 = vld [vmem:[%s77] ss:$2 sm:$0xff]
  %s79 = scalar_lea.vmem %s47, 129
  %v80 = vld [vmem:[%s79] ss:$2 sm:$0xff]
  %s81 = scalar_lea.vmem %s47, 161
  %v82 = vld [vmem:[%s81] ss:$2 sm:$0xff]
  %s83 = scalar_lea.vmem %s47, 193
  %v84 = vld [vmem:[%s83] ss:$2 sm:$0xff]
  %s85 = scalar_lea.vmem %s47, 225
  %v86 = vld [vmem:[%s85] ss:$2 sm:$0xff]
  %v87 = vmax.f32 %v63, %v72
  %v88 = vmax.f32 %v64, %v74
  %v89 = vmax.f32 %v65, %v76
  %v90 = vmax.f32 %v66, %v78
  %v91 = vmax.f32 %v67, %v80
  %v92 = vmax.f32 %v68, %v82
  %v93 = vmax.f32 %v69, %v84
  %v94 = vmax.f32 %v70, %v86
  %vm95 = vcmask 64512
  %96 = vst.msk [vmem:[%s1] sm:$0xff] %vm95, %v87
  %97 = vst.msk [vmem:[%s1 + $0x8] sm:$0xff] %vm95, %v88
  %98 = vst.msk [vmem:[%s1 + $0x10] sm:$0xff] %vm95, %v89
  %99 = vst.msk [vmem:[%s1 + $0x18] sm:$0xff] %vm95, %v90
  %100 = vst.msk [vmem:[%s1 + $0x20] sm:$0xff] %vm95, %v91
  %101 = vst.msk [vmem:[%s1 + $0x28] sm:$0xff] %vm95, %v92
  %102 = vst.msk [vmem:[%s1 + $0x30] sm:$0xff] %vm95, %v93
  %103 = vst.msk [vmem:[%s1 + $0x38] sm:$0xff] %vm95, %v94
  // Predicated region
  $region6: #{_zono_max_pool2d.2} parent=0 // pred_check
    _
  $region7: #{_zono_max_pool2d.2} parent=0 // pred_check_branch
    %105 = sbr.rel (0) target = $region9
  $region8: #{_zono_max_pool2d.2} parent=0 // pred_region
    _
  $region9: #{_zono_max_pool2d.2} parent=0 // pred_fallthru
    _
  // Predicated region
  $region10: #{_zono_max_pool2d.2} parent=0 // pred_check
    _
  $region11: #{_zono_max_pool2d.2} parent=0 // pred_check_branch
    %107 = sbr.rel (0) target = $region13
  $region12: #{_zono_max_pool2d.2} parent=0 // pred_region
    _
  $region13: #{_zono_max_pool2d.2} parent=0 // pred_fallthru
    _

// kernel: _zono_max_pool2d.3
$region0: #{_zono_max_pool2d.3}
  #allocation0 [shape = 'u32[]', space=smem, size = 0x4, offset = 0x4, fixed_abs, tag = 'smem constant byte address 0x4 - core index']
  #allocation1 [shape = 'u32[144,128]{1,0:T(1,128)}', space=vmem, size = 0x12000, scoped, tag = 'internal scratch']
  %s0 = inlined_call_operand.vmem [shape: f32[16,16,24], index: 0, kind: input, shape index: {}]
  %s1 = inlined_call_operand.vmem [shape: f32[8,8,24], index: 1, kind: output, shape index: {}]
  %s2 = sld [smem:[#allocation0]]
  $region14: #{_zono_max_pool2d.3} parent=0
    _
  %s4 = ssub.s32 1, %s2
  %s5 = scalar_select 0, %s4, %s2
  // Predicated region
  $region2: #{_zono_max_pool2d.3} parent=0 // pred_check
    _
  $region3: #{_zono_max_pool2d.3} parent=0 // pred_check_branch
    %7 = sbr.rel (0) target = $region5
  $region4: #{_zono_max_pool2d.3} parent=0 // pred_region
    _
  $region5: #{_zono_max_pool2d.3} parent=0 // pred_fallthru
    _
  %v8 = vld [vmem:[%s0] ss:$2 sm:$0xff]
  %s9 = scalar_lea.vmem %s0, 32
  %v10 = vld [vmem:[%s9] ss:$2 sm:$0xff]
  %s11 = scalar_lea.vmem %s0, 64
  %v12 = vld [vmem:[%s11] ss:$2 sm:$0xff]
  %s13 = scalar_lea.vmem %s0, 96
  %v14 = vld [vmem:[%s13] ss:$2 sm:$0xff]
  %s15 = scalar_lea.vmem %s0, 128
  %v16 = vld [vmem:[%s15] ss:$2 sm:$0xff]
  %s17 = scalar_lea.vmem %s0, 160
  %v18 = vld [vmem:[%s17] ss:$2 sm:$0xff]
  %s19 = scalar_lea.vmem %s0, 192
  %v20 = vld [vmem:[%s19] ss:$2 sm:$0xff]
  %s21 = scalar_lea.vmem %s0, 224
  %v22 = vld [vmem:[%s21] ss:$2 sm:$0xff]
  %s23 = scalar_lea.vmem %s0, 1
  %v24 = vld [vmem:[%s23] ss:$2 sm:$0xff]
  %s25 = scalar_lea.vmem %s0, 33
  %v26 = vld [vmem:[%s25] ss:$2 sm:$0xff]
  %s27 = scalar_lea.vmem %s0, 65
  %v28 = vld [vmem:[%s27] ss:$2 sm:$0xff]
  %s29 = scalar_lea.vmem %s0, 97
  %v30 = vld [vmem:[%s29] ss:$2 sm:$0xff]
  %s31 = scalar_lea.vmem %s0, 129
  %v32 = vld [vmem:[%s31] ss:$2 sm:$0xff]
  %s33 = scalar_lea.vmem %s0, 161
  %v34 = vld [vmem:[%s33] ss:$2 sm:$0xff]
  %s35 = scalar_lea.vmem %s0, 193
  %v36 = vld [vmem:[%s35] ss:$2 sm:$0xff]
  %s37 = scalar_lea.vmem %s0, 225
  %v38 = vld [vmem:[%s37] ss:$2 sm:$0xff]
  %v39 = vmax.f32 %v8, %v24
  %v40 = vmax.f32 %v10, %v26
  %v41 = vmax.f32 %v12, %v28
  %v42 = vmax.f32 %v14, %v30
  %v43 = vmax.f32 %v16, %v32
  %v44 = vmax.f32 %v18, %v34
  %v45 = vmax.f32 %v20, %v36
  %v46 = vmax.f32 %v22, %v38
  %s47 = scalar_lea.vmem %s0, 16
  %v48 = vld [vmem:[%s47] ss:$2 sm:$0xff]
  %s49 = scalar_lea.vmem %s47, 32
  %v50 = vld [vmem:[%s49] ss:$2 sm:$0xff]
  %s51 = scalar_lea.vmem %s47, 64
  %v52 = vld [vmem:[%s51] ss:$2 sm:$0xff]
  %s53 = scalar_lea.vmem %s47, 96
  %v54 = vld [vmem:[%s53] ss:$2 sm:$0xff]
  %s55 = scalar_lea.vmem %s47, 128
  %v56 = vld [vmem:[%s55] ss:$2 sm:$0xff]
  %s57 = scalar_lea.vmem %s47, 160
  %v58 = vld [vmem:[%s57] ss:$2 sm:$0xff]
  %s59 = scalar_lea.vmem %s47, 192
  %v60 = vld [vmem:[%s59] ss:$2 sm:$0xff]
  %s61 = scalar_lea.vmem %s47, 224
  %v62 = vld [vmem:[%s61] ss:$2 sm:$0xff]
  %v63 = vmax.f32 %v39, %v48
  %v64 = vmax.f32 %v40, %v50
  %v65 = vmax.f32 %v41, %v52
  %v66 = vmax.f32 %v42, %v54
  %v67 = vmax.f32 %v43, %v56
  %v68 = vmax.f32 %v44, %v58
  %v69 = vmax.f32 %v45, %v60
  %v70 = vmax.f32 %v46, %v62
  %s71 = scalar_lea.vmem %s47, 1
  %v72 = vld [vmem:[%s71] ss:$2 sm:$0xff]
  %s73 = scalar_lea.vmem %s47, 33
  %v74 = vld [vmem:[%s73] ss:$2 sm:$0xff]
  %s75 = scalar_lea.vmem %s47, 65
  %v76 = vld [vmem:[%s75] ss:$2 sm:$0xff]
  %s77 = scalar_lea.vmem %s47, 97
  %v78 = vld [vmem:[%s77] ss:$2 sm:$0xff]
  %s79 = scalar_lea.vmem %s47, 129
  %v80 = vld [vmem:[%s79] ss:$2 sm:$0xff]
  %s81 = scalar_lea.vmem %s47, 161
  %v82 = vld [vmem:[%s81] ss:$2 sm:$0xff]
  %s83 = scalar_lea.vmem %s47, 193
  %v84 = vld [vmem:[%s83] ss:$2 sm:$0xff]
  %s85 = scalar_lea.vmem %s47, 225
  %v86 = vld [vmem:[%s85] ss:$2 sm:$0xff]
  %v87 = vmax.f32 %v63, %v72
  %v88 = vmax.f32 %v64, %v74
  %v89 = vmax.f32 %v65, %v76
  %v90 = vmax.f32 %v66, %v78
  %v91 = vmax.f32 %v67, %v80
  %v92 = vmax.f32 %v68, %v82
  %v93 = vmax.f32 %v69, %v84
  %v94 = vmax.f32 %v70, %v86
  %vm95 = vcmask 195584
  %96 = vst.msk [vmem:[%s1] sm:$0xff] %vm95, %v87
  %97 = vst.msk [vmem:[%s1 + $0x8] sm:$0xff] %vm95, %v88
  %98 = vst.msk [vmem:[%s1 + $0x10] sm:$0xff] %vm95, %v89
  %99 = vst.msk [vmem:[%s1 + $0x18] sm:$0xff] %vm95, %v90
  %100 = vst.msk [vmem:[%s1 + $0x20] sm:$0xff] %vm95, %v91
  %101 = vst.msk [vmem:[%s1 + $0x28] sm:$0xff] %vm95, %v92
  %102 = vst.msk [vmem:[%s1 + $0x30] sm:$0xff] %vm95, %v93
  %103 = vst.msk [vmem:[%s1 + $0x38] sm:$0xff] %vm95, %v94
  // Predicated region
  $region6: #{_zono_max_pool2d.3} parent=0 // pred_check
    _
  $region7: #{_zono_max_pool2d.3} parent=0 // pred_check_branch
    %105 = sbr.rel (0) target = $region9
  $region8: #{_zono_max_pool2d.3} parent=0 // pred_region
    _
  $region9: #{_zono_max_pool2d.3} parent=0 // pred_fallthru
    _
  // Predicated region
  $region10: #{_zono_max_pool2d.3} parent=0 // pred_check
    _
  $region11: #{_zono_max_pool2d.3} parent=0 // pred_check_branch
    %107 = sbr.rel (0) target = $region13
  $region12: #{_zono_max_pool2d.3} parent=0 // pred_region
    _
  $region13: #{_zono_max_pool2d.3} parent=0 // pred_fallthru
    _

</llo_original>
